<compile_context>
chip_gen: v6e
topology: v6e:2x2x1
jax: 0.10.0
libtpu: 0.0.40
codegen_flags: <defaults>
</compile_context>

<pallas_src>
import jax
import jax.numpy as jnp
from jax import lax
from jax.experimental import pallas as pl
from jax.experimental.pallas import tpu as pltpu

N_FEATURES = 5
HIDDEN = 128
N_ACTIONS = 1
K_PAD = 8            # layer-1 contraction dim padded to a sublane multiple
H2 = 2 * HIDDEN      # fused hidden width (critic || actor)
OUT_COLS = 2         # col 0 = state value, col 1 = mean


def _round_up(n, m):
    return ((n + m - 1) // m) * m


def _policy_kernel(x_ref, w1_ref, b1_ref, wh_ref, bh_ref, out_ref):
    # x:  (TM, 8)   — features padded with zero columns
    # w1: (8, 256)  — [critic layer-1 | actor layer-1], zero rows for padding
    # b1: (1, 256)
    # wh: (256, 2)  — block-diagonal: [:128,0]=w2c, [128:,1]=wm
    # bh: (1, 2)
    x = x_ref[...]

    # fused layer-1: one MXU pass + one LeakyReLU pass over the (TM, 256) slab
    h = jnp.dot(x, w1_ref[...], preferred_element_type=jnp.float32) + b1_ref[...]
    h = jnp.maximum(h, 0.01 * h)                       # LeakyReLU(0.01)

    # fused heads: (TM,256) @ (256,2) -> [value, mean_pre_tanh]
    y = jnp.dot(h, wh_ref[...], preferred_element_type=jnp.float32) + bh_ref[...]

    # tanh only on the mean column (col 1); iota mask avoids lane movement
    col = lax.broadcasted_iota(jnp.int32, y.shape, 1)
    out_ref[...] = jnp.where(col == 1, jnp.tanh(y), y).astype(out_ref.dtype)


def _fuse_params(params):
    """Fold the 4 live Linear layers into (w1, b1, wh, bh) for the kernel."""
    (w1c, b1c, w2c, b2c, w1a, b1a, wm, bm, ws, bs) = params
    del ws, bs  # actor_std head is dead in the module's return value

    # layer 1: concat critic|actor along output dim, pad K 5 -> 8 with zeros
    w1 = jnp.concatenate([w1c, w1a], axis=1)                 # (5, 256)
    w1 = jnp.pad(w1, ((0, K_PAD - N_FEATURES), (0, 0)))      # (8, 256)
    b1 = jnp.concatenate([b1c, b1a], axis=1)                 # (1, 256)

    # head: block-diagonal so critic cols feed value, actor cols feed mean
    wh = jnp.zeros((H2, OUT_COLS), jnp.float32)
    wh = wh.at[:HIDDEN, 0].set(w2c[:, 0])
    wh = wh.at[HIDDEN:, 1].set(wm[:, 0])
    bh = jnp.concatenate([b2c, bm], axis=1)                  # (1, 2)
    return w1, b1, wh, bh


def policy_forward(x, params, *, tm=1024):
    """x: (B, T, N_FEATURES) float32 -> (state_values (B,T,1), mean (B,T,1))."""
    B, T, F = x.shape
    assert F == N_FEATURES
    M = B * T

    # flatten + pad feature dim to 8 and rows to a tile multiple
    TM = min(tm, _round_up(M, 8))
    Mp = _round_up(M, TM)
    x2d = x.reshape(M, F).astype(jnp.float32)
    x2d = jnp.pad(x2d, ((0, Mp - M), (0, K_PAD - F)))        # (Mp, 8)

    w1, b1, wh, bh = _fuse_params(params)

    grid = (Mp // TM,)
    out = pl.pallas_call(
        _policy_kernel,
        out_shape=jax.ShapeDtypeStruct((Mp, OUT_COLS), jnp.float32),
        grid=grid,
        in_specs=[
            pl.BlockSpec((TM, K_PAD), lambda i: (i, 0)),      # x tile (pipelined)
            pl.BlockSpec((K_PAD, H2), lambda i: (0, 0)),      # resident weights
            pl.BlockSpec((1, H2), lambda i: (0, 0)),
            pl.BlockSpec((H2, OUT_COLS), lambda i: (0, 0)),
            pl.BlockSpec((1, OUT_COLS), lambda i: (0, 0)),
        ],
        out_specs=pl.BlockSpec((TM, OUT_COLS), lambda i: (i, 0)),
        compiler_params=pltpu.CompilerParams(
            dimension_semantics=("parallel",)),
    )(x2d, w1, b1, wh, bh)

    out = out[:M]                                            # drop row padding
    state_values = out[:, 0:1].reshape(B, T, 1)
    mean = out[:, 1:2].reshape(B, T, 1)
    return state_values, mean


def init_params(key):
    """Deterministic param init (PyTorch-style uniform fan-in bounds).

    Weights stored as (in_features, out_features); biases as (1, out_features).
    The std head params are created for module fidelity but are unused by
    forward (the torch module never returns std).
    """
    ks = jax.random.split(key, 10)

    def lin(kw, kb, fan_in, fan_out):
        bound = 1.0 / jnp.sqrt(fan_in)
        w = jax.random.uniform(kw, (fan_in, fan_out), jnp.float32, -bound, bound)
        b = jax.random.uniform(kb, (1, fan_out), jnp.float32, -bound, bound)
        return w, b

    w1c, b1c = lin(ks[0], ks[1], N_FEATURES, HIDDEN)   # critic layer 1
    w2c, b2c = lin(ks[2], ks[3], HIDDEN, 1)            # critic layer 2
    w1a, b1a = lin(ks[4], ks[5], N_FEATURES, HIDDEN)   # actor_top
    wm, bm = lin(ks[6], ks[7], HIDDEN, N_ACTIONS)      # actor_mean
    ws, bs = lin(ks[8], ks[9], HIDDEN, N_ACTIONS)      # actor_std (dead)
    return (w1c, b1c, w2c, b2c, w1a, b1a, wm, bm, ws, bs)


def _reference(x, params):
    (w1c, b1c, w2c, b2c, w1a, b1a, wm, bm, ws, bs) = params
    lrelu = lambda v: jnp.where(v > 0, v, 0.01 * v)
    hc = lrelu(x @ w1c + b1c)
    v = hc @ w2c + b2c
    ha = lrelu(x @ w1a + b1a)
    mean = jnp.tanh(ha @ wm + bm)
    return v, mean


if __name__ == "__main__":
    key = jax.random.PRNGKey(0)
    k_x, k_p = jax.random.split(key)

    B, T = 2, 8
    x = jax.random.normal(k_x, (B, T, N_FEATURES), dtype=jnp.float32)
    params = init_params(k_p)

    state_values, mean = policy_forward(x, params)
    jax.block_until_ready((state_values, mean))

    # sanity check against a pure-JAX reference
    v_ref, m_ref = _reference(x, params)
    assert state_values.shape == (B, T, 1) and mean.shape == (B, T, 1)
    assert jnp.allclose(state_values, v_ref, atol=1e-5, rtol=1e-5)
    assert jnp.allclose(mean, m_ref, atol=1e-5, rtol=1e-5)

    print("KERNEL_OK")
</pallas_src>

<mosaic_0001>
module attributes {stable_mosaic.version = 11 : i64} {
  func.func @_policy_kernel(%arg0: i32, %arg1: memref<16x8xf32, #tpu.memory_space<vmem>>, %arg2: memref<8x256xf32, #tpu.memory_space<vmem>>, %arg3: memref<1x256xf32, #tpu.memory_space<vmem>>, %arg4: memref<256x2xf32, #tpu.memory_space<vmem>>, %arg5: memref<1x2xf32, #tpu.memory_space<vmem>>, %arg6: memref<16x2xf32, #tpu.memory_space<vmem>>) attributes {dimension_semantics = [#tpu.dimension_semantics<parallel>], iteration_bounds = array<i64: 1>, scalar_prefetch = 0 : i64, scratch_operands = 0 : i64, tpu.core_type = #tpu.core_type<tc>, window_params = [{transform_indices = @transform_0, window_bounds = array<i64: 16, 8>}, {pipeline_mode = #tpu.pipeline_mode<synchronous>, transform_indices = @transform_1, window_bounds = array<i64: 8, 256>}, {pipeline_mode = #tpu.pipeline_mode<synchronous>, transform_indices = @transform_2, window_bounds = array<i64: 1, 256>}, {pipeline_mode = #tpu.pipeline_mode<synchronous>, transform_indices = @transform_3, window_bounds = array<i64: 256, 2>}, {pipeline_mode = #tpu.pipeline_mode<synchronous>, transform_indices = @transform_4, window_bounds = array<i64: 1, 2>}, {transform_indices = @transform_5, window_bounds = array<i64: 16, 2>}]} {
    %c0 = arith.constant 0 : index
    %c0_0 = arith.constant 0 : index
    %0 = vector.load %arg1[%c0, %c0_0] : memref<16x8xf32, #tpu.memory_space<vmem>>, vector<16x8xf32>
    %c0_1 = arith.constant 0 : index
    %c0_2 = arith.constant 0 : index
    %1 = vector.load %arg2[%c0_1, %c0_2] : memref<8x256xf32, #tpu.memory_space<vmem>>, vector<8x256xf32>
    %cst = arith.constant dense<0.000000e+00> : vector<16x256xf32>
    %2 = tpu.matmul %0, %1, %cst {dimension_numbers = #tpu.dot_dimension_numbers<[1], [0], [0], [1], [0, 0, 1, 1], [], []>} : vector<16x8xf32>, vector<8x256xf32>, vector<16x256xf32> -> vector<16x256xf32>
    %c0_3 = arith.constant 0 : index
    %c0_4 = arith.constant 0 : index
    %3 = vector.load %arg3[%c0_3, %c0_4] : memref<1x256xf32, #tpu.memory_space<vmem>>, vector<1x256xf32>
    %4 = vector.broadcast %3 : vector<1x256xf32> to vector<16x256xf32>
    %5 = arith.addf %2, %4 : vector<16x256xf32>
    %cst_5 = arith.constant 0.00999999977 : f32
    %6 = vector.broadcast %cst_5 : f32 to vector<16x256xf32>
    %7 = arith.mulf %6, %5 : vector<16x256xf32>
    %8 = arith.maximumf %5, %7 : vector<16x256xf32>
    %c0_6 = arith.constant 0 : index
    %c0_7 = arith.constant 0 : index
    %9 = vector.load %arg4[%c0_6, %c0_7] : memref<256x2xf32, #tpu.memory_space<vmem>>, vector<256x2xf32>
    %cst_8 = arith.constant dense<0.000000e+00> : vector<16x2xf32>
    %10 = tpu.matmul %8, %9, %cst_8 {dimension_numbers = #tpu.dot_dimension_numbers<[1], [0], [0], [1], [0, 0, 1, 1], [], []>} : vector<16x256xf32>, vector<256x2xf32>, vector<16x2xf32> -> vector<16x2xf32>
    %c0_9 = arith.constant 0 : index
    %c0_10 = arith.constant 0 : index
    %11 = vector.load %arg5[%c0_9, %c0_10] : memref<1x2xf32, #tpu.memory_space<vmem>>, vector<1x2xf32>
    %12 = vector.broadcast %11 : vector<1x2xf32> to vector<16x2xf32>
    %13 = arith.addf %10, %12 : vector<16x2xf32>
    %14 = tpu.iota {dimensions = array<i32: 1>} : vector<16x2xi32>
    %c1_i32 = arith.constant 1 : i32
    %15 = vector.broadcast %c1_i32 : i32 to vector<16x2xi32>
    %16 = arith.cmpi eq, %14, %15 : vector<16x2xi32>
    %17 = math.tanh %13 : vector<16x2xf32>
    %18 = arith.select %16, %17, %13 : vector<16x2xi1>, vector<16x2xf32>
    %c0_11 = arith.constant 0 : index
    %c0_12 = arith.constant 0 : index
    %19 = vector.load %arg6[%c0_11, %c0_12] : memref<16x2xf32, #tpu.memory_space<vmem>>, vector<16x2xf32>
    tpu.vector_store %arg6[%c0_11, %c0_12], %18 {strides = array<i32>} : memref<16x2xf32, #tpu.memory_space<vmem>>, vector<16x2xf32>,
    return
  }
  func.func @transform_0(%arg0: i32) -> (i32, i32) {
    %c0_i32 = arith.constant 0 : i32
    %c0_i32_0 = arith.constant 0 : i32
    return %arg0, %c0_i32 : i32, i32
  }
  func.func @transform_1(%arg0: i32) -> (i32, i32) {
    %c0_i32 = arith.constant 0 : i32
    %c0_i32_0 = arith.constant 0 : i32
    %c0_i32_1 = arith.constant 0 : i32
    return %c0_i32, %c0_i32_0 : i32, i32
  }
  func.func @transform_2(%arg0: i32) -> (i32, i32) {
    %c0_i32 = arith.constant 0 : i32
    %c0_i32_0 = arith.constant 0 : i32
    %c0_i32_1 = arith.constant 0 : i32
    return %c0_i32, %c0_i32_0 : i32, i32
  }
  func.func @transform_3(%arg0: i32) -> (i32, i32) {
    %c0_i32 = arith.constant 0 : i32
    %c0_i32_0 = arith.constant 0 : i32
    %c0_i32_1 = arith.constant 0 : i32
    return %c0_i32, %c0_i32_0 : i32, i32
  }
  func.func @transform_4(%arg0: i32) -> (i32, i32) {
    %c0_i32 = arith.constant 0 : i32
    %c0_i32_0 = arith.constant 0 : i32
    %c0_i32_1 = arith.constant 0 : i32
    return %c0_i32, %c0_i32_0 : i32, i32
  }
  func.func @transform_5(%arg0: i32) -> (i32, i32) {
    %c0_i32 = arith.constant 0 : i32
    %c0_i32_0 = arith.constant 0 : i32
    return %arg0, %c0_i32 : i32, i32
  }
}

</mosaic_0001>

<llo_original>
// kernel: tpu_custom_call.1
$region0: #{tpu_custom_call.1}
  #allocation0 [shape = 'u32[]', space=smem, size = 0x4, offset = 0x4, fixed_abs, tag = 'smem constant byte address 0x4 - core index']
  #allocation1 [shape = 'u32[144,128]{1,0:T(1,128)}', space=vmem, size = 0x12000, scoped, tag = 'internal scratch']
  %s0 = inlined_call_operand.vmem [shape: f32[16,8], index: 0, kind: input, shape index: {}]
  %s1 = inlined_call_operand.vmem [shape: f32[8,256], index: 1, kind: input, shape index: {}]
  %s2 = inlined_call_operand.vmem [shape: f32[1,256], index: 2, kind: input, shape index: {}]
  %s3 = inlined_call_operand.vmem [shape: f32[256,2], index: 3, kind: input, shape index: {}]
  %s4 = inlined_call_operand.vmem [shape: f32[1,2], index: 4, kind: input, shape index: {}]
  %s5 = inlined_call_operand.vmem [shape: f32[16,2], index: 5, kind: output, shape index: {}]
  %s6 = sld [smem:[#allocation0]]
  $region30: #{tpu_custom_call.1} parent=0
    _
  %s8 = ssub.s32 1, %s6
  %s9 = scalar_select 0, %s8, %s6
  // Predicated region
  $region2: #{tpu_custom_call.1} parent=0 // pred_check
    _
  $region3: #{tpu_custom_call.1} parent=0 // pred_check_branch
    %11 = sbr.rel (0) target = $region5
  $region4: #{tpu_custom_call.1} parent=0 // pred_region
    _
  $region5: #{tpu_custom_call.1} parent=0 // pred_fallthru
    _
  // Predicated region
  $region6: #{tpu_custom_call.1} parent=0 // pred_check
    _
  $region7: #{tpu_custom_call.1} parent=0 // pred_check_branch
    %13 = sbr.rel (0) target = $region9
  $region8: #{tpu_custom_call.1} parent=0 // pred_region
    _
  $region9: #{tpu_custom_call.1} parent=0 // pred_fallthru
    _
  // Predicated region
  $region10: #{tpu_custom_call.1} parent=0 // pred_check
    _
  $region11: #{tpu_custom_call.1} parent=0 // pred_check_branch
    %15 = sbr.rel (0) target = $region13
  $region12: #{tpu_custom_call.1} parent=0 // pred_region
    _
  $region13: #{tpu_custom_call.1} parent=0 // pred_fallthru
    _
  // Predicated region
  $region14: #{tpu_custom_call.1} parent=0 // pred_check
    _
  $region15: #{tpu_custom_call.1} parent=0 // pred_check_branch
    %17 = sbr.rel (0) target = $region17
  $region16: #{tpu_custom_call.1} parent=0 // pred_region
    _
  $region17: #{tpu_custom_call.1} parent=0 // pred_fallthru
    _
  // Predicated region
  $region18: #{tpu_custom_call.1} parent=0 // pred_check
    _
  $region19: #{tpu_custom_call.1} parent=0 // pred_check_branch
    %19 = sbr.rel (0) target = $region21
  $region20: #{tpu_custom_call.1} parent=0 // pred_region
    _
  $region21: #{tpu_custom_call.1} parent=0 // pred_fallthru
    _
  %v20 = vld [vmem:[%s0] sm:$0xff]
  %v21 = vld [vmem:[%s0 + $0x8] sm:$0xff]
  %v22 = vld [vmem:[%s1] sm:$0xff]
  %v23 = vld [vmem:[%s1 + $0x8] sm:$0xff]
  %v24 = vld [vmem:[%s2] sm:$0x3]
  %v26 = vlaneseq
  %v27 = vshrl.u32 %v26, 7
  %v28 = vsub.s32 0, %v27
  %v29 = vrot.slane %v24, %v28
  %v30 = vlaneseq
  %v31 = vshrl.u32 %v30, 7
  %v32 = vsub.s32 1, %v31
  %v33 = vrot.slane %v24, %v32
  %vm36 = vcmask 64512
  %v38 = vsel %vm36, %v20, 0
  %v41 = vsel %vm36, %v21, 0
  %43 = vmatprep.subr.mxu0 0.0
  %44 = vmatpush1.msra.mxu0 0.0
  %45 = vmatprep.subr.mxu0 0.0
  %46 = vmatpush1.msra.mxu0 0.0
  %47 = vmatprep.subr.mxu0 0.0
  %48 = vmatpush1.msra.mxu0 0.0
  %49 = vmatprep.subr.mxu0 0.0
  %50 = vmatpush1.msra.mxu0 0.0
  %51 = vmatprep.subr.mxu0 0.0
  %52 = vmatpush1.msra.mxu0 0.0
  %53 = vmatprep.subr.mxu0 0.0
  %54 = vmatpush1.msra.mxu0 0.0
  %55 = vmatprep.subr.mxu0 0.0
  %56 = vmatpush1.msra.mxu0 0.0
  %57 = vmatprep.subr.mxu0 0.0
  %58 = vmatpush1.msra.mxu0 0.0
  %59 = vmatprep.subr.mxu0 0.0
  %60 = vmatpush1.msra.mxu0 0.0
  %61 = vmatprep.subr.mxu0 0.0
  %62 = vmatpush1.msra.mxu0 0.0
  %63 = vmatprep.subr.mxu0 0.0
  %64 = vmatpush1.msra.mxu0 0.0
  %65 = vmatprep.subr.mxu0 0.0
  %66 = vmatpush1.msra.mxu0 0.0
  %67 = vmatprep.subr.mxu0 0.0
  %68 = vmatpush1.msra.mxu0 0.0
  %69 = vmatprep.subr.mxu0 0.0
  %70 = vmatpush1.msra.mxu0 0.0
  %71 = vmatprep.subr.mxu0 0.0
  %72 = vmatpush1.msra.mxu0 0.0
  %73 = vmatprep.subr.mxu0 %v23
  %74 = vmatpush1.msra.mxu0 %v22
  %75 = vmatprep.subr.mxu0 0.0
  %76 = vmatpush2.msra.mxu0 0.0
  %77 = vmatprep.subr.mxu0 0.0
  %78 = vmatpush2.msra.mxu0 0.0
  %79 = vmatprep.subr.mxu0 0.0
  %80 = vmatpush2.msra.mxu0 0.0
  %81 = vmatprep.subr.mxu0 0.0
  %82 = vmatpush2.msra.mxu0 0.0
  %83 = vmatprep.subr.mxu0 0.0
  %84 = vmatpush2.msra.mxu0 0.0
  %85 = vmatprep.subr.mxu0 0.0
  %86 = vmatpush2.msra.mxu0 0.0
  %87 = vmatprep.subr.mxu0 0.0
  %88 = vmatpush2.msra.mxu0 0.0
  %89 = vmatprep.subr.mxu0 0.0
  %90 = vmatpush2.msra.mxu0 0.0
  %91 = vmatprep.subr.mxu0 0.0
  %92 = vmatpush2.msra.mxu0 0.0
  %93 = vmatprep.subr.mxu0 0.0
  %94 = vmatpush2.msra.mxu0 0.0
  %95 = vmatprep.subr.mxu0 0.0
  %96 = vmatpush2.msra.mxu0 0.0
  %97 = vmatprep.subr.mxu0 0.0
  %98 = vmatpush2.msra.mxu0 0.0
  %99 = vmatprep.subr.mxu0 0.0
  %100 = vmatpush2.msra.mxu0 0.0
  %101 = vmatprep.subr.mxu0 0.0
  %102 = vmatpush2.msra.mxu0 0.0
  %103 = vmatprep.subr.mxu0 0.0
  %104 = vmatpush2.msra.mxu0 0.0
  %105 = vmatprep.subr.mxu0 0.0
  %106 = vmatpush2.msra.mxu0 0.0
  %107 = vmatprep.mubr.f32.mxu0 0.0
  %108 = vmatmul.mubr.f32.gmra.mxu0 %v38
  %v109 = vpop.f32.mrf.mxu0
  %v110 = vadd.f32 %v29, %v109
  %v111 = vpop.f32.mrf.mxu0
  %v112 = vadd.f32 %v33, %v111
  %113 = vmatprep.mubr.f32.mxu0 0.0
  %114 = vmatmul.mubr.f32.gmra.mxu0 %v41
  %v115 = vpop.f32.mrf.mxu0
  %v116 = vadd.f32 %v29, %v115
  %v117 = vpop.f32.mrf.mxu0
  %v118 = vadd.f32 %v33, %v117
  %119 = vdwg.mxu0
  %v120 = vmul.f32 %v110, 0.01
  %v121 = vmul.f32 %v112, 0.01
  %v122 = vmul.f32 %v116, 0.01
  %v123 = vmul.f32 %v118, 0.01
  %v124 = vmax.f32 %v110, %v120
  %v125 = vmax.f32 %v112, %v121
  %v126 = vmax.f32 %v116, %v122
  %v127 = vmax.f32 %v118, %v123
  %v128 = vld [vmem:[%s3] sm:$0xff]
  %v129 = vld [vmem:[%s3 + $0x8] sm:$0xff]
  %v130 = vld [vmem:[%s3 + $0x10] sm:$0xff]
  %v131 = vld [vmem:[%s3 + $0x18] sm:$0xff]
  %v132 = vld [vmem:[%s3 + $0x20] sm:$0xff]
  %v133 = vld [vmem:[%s3 + $0x28] sm:$0xff]
  %v134 = vld [vmem:[%s3 + $0x30] sm:$0xff]
  %v135 = vld [vmem:[%s3 + $0x38] sm:$0xff]
  %v136 = vld [vmem:[%s3 + $0x40] sm:$0xff]
  %v137 = vld [vmem:[%s3 + $0x48] sm:$0xff]
  %v138 = vld [vmem:[%s3 + $0x50] sm:$0xff]
  %v139 = vld [vmem:[%s3 + $0x58] sm:$0xff]
  %v140 = vld [vmem:[%s3 + $0x60] sm:$0xff]
  %v141 = vld [vmem:[%s3 + $0x68] sm:$0xff]
  %v142 = vld [vmem:[%s3 + $0x70] sm:$0xff]
  %v143 = vld [vmem:[%s3 + $0x78] sm:$0xff]
  %v144 = vld [vmem:[%s3 + $0x80] sm:$0xff]
  %v145 = vld [vmem:[%s3 + $0x88] sm:$0xff]
  %v146 = vld [vmem:[%s3 + $0x90] sm:$0xff]
  %v147 = vld [vmem:[%s3 + $0x98] sm:$0xff]
  %v148 = vld [vmem:[%s3 + $0xa0] sm:$0xff]
  %v149 = vld [vmem:[%s3 + $0xa8] sm:$0xff]
  %v150 = vld [vmem:[%s3 + $0xb0] sm:$0xff]
  %v151 = vld [vmem:[%s3 + $0xb8] sm:$0xff]
  %v152 = vld [vmem:[%s3 + $0xc0] sm:$0xff]
  %v153 = vld [vmem:[%s3 + $0xc8] sm:$0xff]
  %v154 = vld [vmem:[%s3 + $0xd0] sm:$0xff]
  %v155 = vld [vmem:[%s3 + $0xd8] sm:$0xff]
  %v156 = vld [vmem:[%s3 + $0xe0] sm:$0xff]
  %v157 = vld [vmem:[%s3 + $0xe8] sm:$0xff]
  %v158 = vld [vmem:[%s3 + $0xf0] sm:$0xff]
  %v159 = vld [vmem:[%s3 + $0xf8] sm:$0xff]
  %v160 = vld [vmem:[%s4] sm:$0x1]
  %v162 = vlaneseq
  %v163 = vshrl.u32 %v162, 7
  %v164 = vsub.s32 0, %v163
  %v165 = vrot.slane %v160, %v164
  %167 = vmatprep.subr.mxu0 0.0
  %168 = vmatpush1.msra.mxu0 %v143
  %169 = vmatprep.subr.mxu0 0.0
  %170 = vmatpush1.msra.mxu0 %v142
  %171 = vmatprep.subr.mxu0 0.0
  %172 = vmatpush1.msra.mxu0 %v141
  %173 = vmatprep.subr.mxu0 0.0
  %174 = vmatpush1.msra.mxu0 %v140
  %175 = vmatprep.subr.mxu0 0.0
  %176 = vmatpush1.msra.mxu0 %v139
  %177 = vmatprep.subr.mxu0 0.0
  %178 = vmatpush1.msra.mxu0 %v138
  %179 = vmatprep.subr.mxu0 0.0
  %180 = vmatpush1.msra.mxu0 %v137
  %181 = vmatprep.subr.mxu0 0.0
  %182 = vmatpush1.msra.mxu0 %v136
  %183 = vmatprep.subr.mxu0 0.0
  %184 = vmatpush1.msra.mxu0 %v135
  %185 = vmatprep.subr.mxu0 0.0
  %186 = vmatpush1.msra.mxu0 %v134
  %187 = vmatprep.subr.mxu0 0.0
  %188 = vmatpush1.msra.mxu0 %v133
  %189 = vmatprep.subr.mxu0 0.0
  %190 = vmatpush1.msra.mxu0 %v132
  %191 = vmatprep.subr.mxu0 0.0
  %192 = vmatpush1.msra.mxu0 %v131
  %193 = vmatprep.subr.mxu0 0.0
  %194 = vmatpush1.msra.mxu0 %v130
  %195 = vmatprep.subr.mxu0 0.0
  %196 = vmatpush1.msra.mxu0 %v129
  %197 = vmatprep.subr.mxu0 0.0
  %198 = vmatpush1.msra.mxu0 %v128
  %199 = vmatprep.subr.mxu0 0.0
  %200 = vmatpush2.msra.mxu0 %v159
  %201 = vmatprep.subr.mxu0 0.0
  %202 = vmatpush2.msra.mxu0 %v158
  %203 = vmatprep.subr.mxu0 0.0
  %204 = vmatpush2.msra.mxu0 %v157
  %205 = vmatprep.subr.mxu0 0.0
  %206 = vmatpush2.msra.mxu0 %v156
  %207 = vmatprep.subr.mxu0 0.0
  %208 = vmatpush2.msra.mxu0 %v155
  %209 = vmatprep.subr.mxu0 0.0
  %210 = vmatpush2.msra.mxu0 %v154
  %211 = vmatprep.subr.mxu0 0.0
  %212 = vmatpush2.msra.mxu0 %v153
  %213 = vmatprep.subr.mxu0 0.0
  %214 = vmatpush2.msra.mxu0 %v152
  %215 = vmatprep.subr.mxu0 0.0
  %216 = vmatpush2.msra.mxu0 %v151
  %217 = vmatprep.subr.mxu0 0.0
  %218 = vmatpush2.msra.mxu0 %v150
  %219 = vmatprep.subr.mxu0 0.0
  %220 = vmatpush2.msra.mxu0 %v149
  %221 = vmatprep.subr.mxu0 0.0
  %222 = vmatpush2.msra.mxu0 %v148
  %223 = vmatprep.subr.mxu0 0.0
  %224 = vmatpush2.msra.mxu0 %v147
  %225 = vmatprep.subr.mxu0 0.0
  %226 = vmatpush2.msra.mxu0 %v146
  %227 = vmatprep.subr.mxu0 0.0
  %228 = vmatpush2.msra.mxu0 %v145
  %229 = vmatprep.subr.mxu0 0.0
  %230 = vmatpush2.msra.mxu0 %v144
  %231 = vmatprep.mubr.f32.mxu0 %v125
  %232 = vmatmul.mubr.f32.gmra.mxu0 %v124
  %v233 = vpop.f32.mrf.mxu0
  %v234 = vadd.f32 %v165, %v233
  %v235 = vpop.f32.mrf.mxu0
  %236 = vmatprep.mubr.f32.mxu0 %v127
  %237 = vmatmul.mubr.f32.gmra.mxu0 %v126
  %v238 = vpop.f32.mrf.mxu0
  %v239 = vadd.f32 %v165, %v238
  %v240 = vpop.f32.mrf.mxu0
  %241 = vdwg.mxu0
  %v242 = vlaneseq
  %v243 = vand.u32 %v242, 127
  %vm244 = vcmp.eq.s32.totalorder %v243, 1
  %v245 = vtanh.pop %v234
  %v246 = vtanh.pop %v239
  %v247 = vsel %vm244, %v245, %v234
  %v248 = vsel %vm244, %v246, %v239
  %vm249 = vcmask 15360
  %250 = vst.msk [vmem:[%s5] sm:$0xff] %vm249, %v247
  %251 = vst.msk [vmem:[%s5 + $0x8] sm:$0xff] %vm249, %v248
  // Predicated region
  $region22: #{tpu_custom_call.1} parent=0 // pred_check
    _
  $region23: #{tpu_custom_call.1} parent=0 // pred_check_branch
    %253 = sbr.rel (0) target = $region25
  $region24: #{tpu_custom_call.1} parent=0 // pred_region
    _
  $region25: #{tpu_custom_call.1} parent=0 // pred_fallthru
    _
  // Predicated region
  $region26: #{tpu_custom_call.1} parent=0 // pred_check
    _
  $region27: #{tpu_custom_call.1} parent=0 // pred_check_branch
    %255 = sbr.rel (0) target = $region29
  $region28: #{tpu_custom_call.1} parent=0 // pred_region
    _
  $region29: #{tpu_custom_call.1} parent=0 // pred_fallthru
    _

</llo_original>
